<compile_context>
chip_gen: v7x
topology: tpu7x:2x2x1
jax: 0.10.0
libtpu: 0.0.40
codegen_flags: <defaults>
</compile_context>

<pallas_src>
import functools

import jax
import jax.numpy as jnp
from jax.experimental import pallas as pl
from jax.experimental.pallas import tpu as pltpu

NEIGHBORHOOD_SIZE = 3

_SUBLANE = 8
_TARGET_BLOCK_BYTES = 4 * 1024 * 1024        # ~4 MiB blocks: >=85% of HBM roofline measured
_MAX_SINGLE_BLOCK_BYTES = 8 * 1024 * 1024    # cap for a single (possibly 8-row) block


class InvalidShapeError(Exception):
    pass


def _check_shapes(in_channels, vertices, edges):
    if vertices.ndim != 3:
        raise InvalidShapeError(
            f"Expected # axis for vertices is 3 (batch x channel x node) "
            f"but now it is {vertices.ndim}")
    if edges.ndim != 4:
        raise InvalidShapeError(
            f"Expected # axis for edges is 4 (batch x channel x node x neighbor_index), "
            f"but now it is {edges.ndim}")
    if vertices.shape[1] != in_channels:
        raise InvalidShapeError(
            f"Expected # of channels in vertices is {in_channels}, "
            f"but now it is {vertices.shape[1]}")
    if edges.shape[1] != 1:
        raise InvalidShapeError(
            f"Expected # of channels in edges is 1, but now it is {edges.shape[1]}")
    if edges.shape[-1] != NEIGHBORHOOD_SIZE:
        raise InvalidShapeError(
            f"Expected # of edges for each node is {NEIGHBORHOOD_SIZE}, "
            f"but now it is {edges.shape[-1]}")


# ------------------------------- helpers -------------------------------------


def _single_buffered_spec(block_shape, index_map):
    """BlockSpec for constant (never re-fetched) inputs: single VMEM buffer."""
    try:
        return pl.BlockSpec(block_shape, index_map, pipeline_mode=pl.Buffered(1))
    except TypeError:  # older JAX without pipeline_mode: fall back to default buffering
        return pl.BlockSpec(block_shape, index_map)


def _vmem_limit(block_buffer_bytes):
    """Scoped-VMEM limit: clear v5e's 16 MiB default, never exceed physical capacity."""
    try:
        cap = int(pltpu.get_tpu_info().vmem_capacity_bytes)
    except Exception:  # noqa: BLE001 - interpret mode / older API
        cap = 64 * 1024 * 1024  # conservative: v7x per-TC VMEM
    headroom = 8 * 1024 * 1024  # leave room for Mosaic internal scratch / temporaries
    needed = block_buffer_bytes + 2 * 1024 * 1024
    return int(min(max(needed, 32 * 1024 * 1024), cap - headroom))


# --------------------------- whole-row path -----------------------------------


def _ln_whole_row_kernel(v_ref, g_ref, b_ref, o_ref, *, eps, inv_count, n_pad):
    # v_ref: (TB, Lp) block -- TB batch rows, each row the (zero-padded) flattened (C*N).
    v = v_ref[...].astype(jnp.float32)

    # Two-pass statistics (better conditioned than E[x^2]-E[x]^2); the extra VPU sweep is
    # hidden under the HBM DMA.  Pad lanes are zero: sum unchanged, inv_count = 1/L_true.
    mean = jnp.sum(v, axis=1, keepdims=True) * inv_count           # (TB, 1)
    d = v - mean
    css = jnp.sum(d * d, axis=1, keepdims=True)                     # centered sum of squares
    if n_pad:  # subtract the exact (0 - mean)^2 contribution of the n_pad zero lanes
        css = css - n_pad * (mean * mean)
    var = jnp.maximum(css * inv_count, 0.0)                         # biased variance (1/L)
    inv = 1.0 / (jnp.sqrt(var) + eps)                               # torch: 1/(std + eps)

    # gamma/beta rows are f32 (1, Lp); pad lanes carry gamma=beta=0.
    o_ref[...] = ((d * inv) * g_ref[...] + b_ref[...]).astype(o_ref.dtype)


def _whole_row_layer_norm(v2d, gamma_row, beta_row, *, B, L, Lp, eps, itemsize,
                          out_dtype, block_rows=None):
    row_bytes = Lp * itemsize
    if block_rows is not None:
        tb = max(1, min(int(block_rows), B))
    elif B < _SUBLANE or B * row_bytes <= _TARGET_BLOCK_BYTES:
        tb = B  # small problem: one (or few) blocks; splitting can't stay sublane-aligned
        if B >= 2 * _SUBLANE:
            # still give v7x's 2nd TensorCore work: >=2 sublane-aligned steps
            tb = max(_SUBLANE, (pl.cdiv(B, 2) // _SUBLANE) * _SUBLANE)
    else:
        # ~4 MiB sublane-aligned blocks, >=2 (ideally >=4) grid steps: pipelined DMA
        # overlap + v7x megacore sharding of the batch axis.
        rows_target = max(1, _TARGET_BLOCK_BYTES // row_bytes)
        tb = min(rows_target, max(_SUBLANE, pl.cdiv(B, 4)))
        tb = max(_SUBLANE, (tb // _SUBLANE) * _SUBLANE)
        tb = min(tb, B)
    grid_b = pl.cdiv(B, tb)

    kernel = functools.partial(_ln_whole_row_kernel, eps=float(eps),
                               inv_count=1.0 / float(L), n_pad=float(Lp - L))
    # in: tb*Lp (x2 buffers) + out: tb*Lp (x2) + gamma/beta single-buffered f32 rows.
    buf_bytes = 4 * tb * Lp * itemsize + 2 * Lp * 4
    return pl.pallas_call(
        kernel,
        out_shape=jax.ShapeDtypeStruct((B, Lp), out_dtype),
        grid_spec=pltpu.PrefetchScalarGridSpec(
            num_scalar_prefetch=0,
            grid=(grid_b,),
            in_specs=[
                pl.BlockSpec((tb, Lp), lambda i: (i, 0)),
                _single_buffered_spec((1, Lp), lambda i: (0, 0)),
                _single_buffered_spec((1, Lp), lambda i: (0, 0)),
            ],
            out_specs=pl.BlockSpec((tb, Lp), lambda i: (i, 0)),
        ),
        compiler_params=pltpu.CompilerParams(
            dimension_semantics=("parallel",),
            vmem_limit_bytes=_vmem_limit(buf_bytes),
        ),
    )(v2d, gamma_row, beta_row)


# --------------------------- L-tiled two-pass path ----------------------------


def _stats_kernel(v_ref, mean_ref, inv_ref, s1_ref, s2_ref, *, eps, inv_count):
    l = pl.program_id(1)

    @pl.when(l == 0)
    def _():
        s1_ref[...] = jnp.zeros_like(s1_ref)
        s2_ref[...] = jnp.zeros_like(s2_ref)

    v = v_ref[...].astype(jnp.float32)
    s1_ref[...] += jnp.sum(v, axis=1, keepdims=True)
    s2_ref[...] += jnp.sum(v * v, axis=1, keepdims=True)

    @pl.when(l == pl.num_programs(1) - 1)
    def _():
        # TODO(synk): single-pass E[x^2]-E[x]^2 can lose precision when |mean| >> std over
        # very large L; a shifted/Welford formulation would need an extra HBM pass.
        mean = s1_ref[...] * inv_count
        var = jnp.maximum(s2_ref[...] * inv_count - mean * mean, 0.0)
        mean_ref[...] = mean
        inv_ref[...] = 1.0 / (jnp.sqrt(var) + eps)


def _norm_kernel(v_ref, mean_ref, inv_ref, g_ref, b_ref, o_ref):
    v = v_ref[...].astype(jnp.float32)
    d = v - mean_ref[...]
    o_ref[...] = ((d * inv_ref[...]) * g_ref[...] + b_ref[...]).astype(o_ref.dtype)


def _tiled_layer_norm(v2d, gamma_row, beta_row, *, B, L, Lp, eps, itemsize,
                      out_dtype, block_rows=None, lane_block=None):
    tb = int(block_rows) if block_rows is not None else (B if B <= _SUBLANE else _SUBLANE)
    tb = max(1, min(tb, B))
    if lane_block is not None:
        tl = int(lane_block)
        if tl % 128 != 0 or Lp % tl != 0:
            raise ValueError(f"lane_block={tl} must be a multiple of 128 dividing Lp={Lp}")
    else:
        # largest multiple of 128 that divides Lp and keeps the v block around ~4 MiB
        m = Lp // 128
        g_desired = max(1, (_TARGET_BLOCK_BYTES // max(1, tb * itemsize)) // 128)
        g = 1
        for d in range(min(g_desired, m), 0, -1):
            if m % d == 0:
                g = d
                break
        tl = 128 * g
    grid_b = pl.cdiv(B, tb)
    grid_l = Lp // tl

    # Pass 1: per-row mean and 1/(std+eps), accumulated over L tiles (reduction axis last).
    stats_kernel = functools.partial(_stats_kernel, eps=float(eps), inv_count=1.0 / float(L))
    mean, inv = pl.pallas_call(
        stats_kernel,
        out_shape=(jax.ShapeDtypeStruct((B, 1), jnp.float32),
                   jax.ShapeDtypeStruct((B, 1), jnp.float32)),
        grid_spec=pltpu.PrefetchScalarGridSpec(
            num_scalar_prefetch=0,
            grid=(grid_b, grid_l),
            in_specs=[pl.BlockSpec((tb, tl), lambda i, l: (i, l))],
            out_specs=[pl.BlockSpec((tb, 1), lambda i, l: (i, 0)),
                       pl.BlockSpec((tb, 1), lambda i, l: (i, 0))],
            scratch_shapes=[pltpu.VMEM((tb, 1), jnp.float32),
                            pltpu.VMEM((tb, 1), jnp.float32)],
        ),
        compiler_params=pltpu.CompilerParams(
            dimension_semantics=("parallel", "arbitrary"),
            vmem_limit_bytes=_vmem_limit(2 * tb * tl * itemsize + 16 * tb * 4),
        ),
    )(v2d)

    # Pass 2: normalize tile-by-tile.  Batch axis innermost so gamma/beta tiles are only
    # fetched once per L tile (not once per (i, l) step).
    buf_bytes = 4 * tb * tl * itemsize + 4 * tl * 4 + 16 * tb * 4
    return pl.pallas_call(
        _norm_kernel,
        out_shape=jax.ShapeDtypeStruct((B, Lp), out_dtype),
        grid_spec=pltpu.PrefetchScalarGridSpec(
            num_scalar_prefetch=0,
            grid=(grid_l, grid_b),
            in_specs=[
                pl.BlockSpec((tb, tl), lambda l, i: (i, l)),
                pl.BlockSpec((tb, 1), lambda l, i: (i, 0)),
                pl.BlockSpec((tb, 1), lambda l, i: (i, 0)),
                pl.BlockSpec((1, tl), lambda l, i: (0, l)),
                pl.BlockSpec((1, tl), lambda l, i: (0, l)),
            ],
            out_specs=pl.BlockSpec((tb, tl), lambda l, i: (i, l)),
        ),
        compiler_params=pltpu.CompilerParams(
            dimension_semantics=("parallel", "parallel"),
            vmem_limit_bytes=_vmem_limit(buf_bytes),
        ),
    )(v2d, mean, inv, gamma_row, beta_row)


# --------------------------------- wrapper ------------------------------------


def binary_tree_layer_norm(vertices, edges, gamma, beta, *, eps=1e-5,
                           block_rows=None, lane_block=None, force_tiled=None):
    """vertices: (B, C, N); edges: (B, 1, N, 3) (shape-checked only); gamma, beta: (C,)."""
    _check_shapes(in_channels=gamma.shape[0], vertices=vertices, edges=edges)
    B, C, N = vertices.shape
    L = C * N
    Lp = ((L + 127) // 128) * 128          # lane-dense: pad to a 128 multiple
    itemsize = vertices.dtype.itemsize     # HBM I/O bytes follow the input dtype
    out_dtype = vertices.dtype

    v2d = vertices.reshape(B, L)
    gamma_row = jnp.repeat(gamma.astype(jnp.float32), N)   # per-(c, n) scale, row-major
    beta_row = jnp.repeat(beta.astype(jnp.float32), N)
    if Lp != L:
        # Zero padding keeps the statistics exact (inv_count stays 1/L) and makes every
        # DMA/store full-lane and unmasked; padded output lanes are sliced off below.
        v2d = jnp.pad(v2d, ((0, 0), (0, Lp - L)))
        gamma_row = jnp.pad(gamma_row, (0, Lp - L))
        beta_row = jnp.pad(beta_row, (0, Lp - L))
    gamma_row = gamma_row.reshape(1, Lp)
    beta_row = beta_row.reshape(1, Lp)

    row_bytes = Lp * itemsize
    use_tiled = force_tiled
    if use_tiled is None:
        # Tile over L (two HBM passes) only when even an aligned 8-row block would blow the
        # single-block cap and the whole batch does not fit in one small block either.
        use_tiled = (_SUBLANE * row_bytes > _MAX_SINGLE_BLOCK_BYTES
                     and B * row_bytes > _MAX_SINGLE_BLOCK_BYTES)

    if use_tiled:
        out2d = _tiled_layer_norm(v2d, gamma_row, beta_row, B=B, L=L, Lp=Lp, eps=eps,
                                  itemsize=itemsize, out_dtype=out_dtype,
                                  block_rows=block_rows, lane_block=lane_block)
    else:
        out2d = _whole_row_layer_norm(v2d, gamma_row, beta_row, B=B, L=L, Lp=Lp, eps=eps,
                                      itemsize=itemsize, out_dtype=out_dtype,
                                      block_rows=block_rows)
    if Lp != L:
        out2d = out2d[:, :L]
    return out2d.reshape(B, C, N)


def _reference(vertices, gamma, beta, eps=1e-5):
    mean = jnp.mean(vertices, axis=(1, 2), keepdims=True)
    std = jnp.sqrt(jnp.mean((vertices - mean) ** 2, axis=(1, 2), keepdims=True))  # biased
    normed = (vertices - mean) / (std + eps)
    return gamma.reshape(1, -1, 1) * normed + beta.reshape(1, -1, 1)


if __name__ == "__main__":
    key = jax.random.PRNGKey(0)
    k1, k2, k3, k4, k5 = jax.random.split(key, 5)

    # --- default (whole-row) path, module-default params (gamma=1, beta=0) ---
    B, C, N = 2, 4, 16
    vertices = jax.random.normal(k1, (B, C, N), dtype=jnp.float32)
    edges = jax.random.randint(k2, (B, 1, N, NEIGHBORHOOD_SIZE), 0, N)
    gamma = jnp.ones((C,), dtype=jnp.float32)
    beta = jnp.zeros((C,), dtype=jnp.float32)
    out = jax.block_until_ready(binary_tree_layer_norm(vertices, edges, gamma, beta, eps=1e-5))
    ref = _reference(vertices, gamma, beta, eps=1e-5)
    assert out.shape == (B, C, N)
    assert jnp.allclose(out, ref, atol=5e-5, rtol=5e-5), "mismatch (default params)"

    # --- multi-step whole-row grid (partial edge block) + non-trivial affine params ---
    B2, C2, N2 = 10, 4, 16
    v2 = 1.5 + jax.random.normal(k3, (B2, C2, N2), dtype=jnp.float32)   # offset: tests 2-pass var
    e2 = jax.random.randint(k2, (B2, 1, N2, NEIGHBORHOOD_SIZE), 0, N2)
    g2 = 1.0 + 0.1 * jax.random.normal(k4, (C2,), dtype=jnp.float32)
    b2 = 0.1 * jax.random.normal(k5, (C2,), dtype=jnp.float32)
    out2 = jax.block_until_ready(
        binary_tree_layer_norm(v2, e2, g2, b2, eps=1e-5, block_rows=8))
    assert jnp.allclose(out2, _reference(v2, g2, b2, eps=1e-5), atol=5e-5, rtol=5e-5), \
        "mismatch (multi-block whole-row path)"

    # --- forced L-tiled two-pass path (huge-row fallback), exercised at small shapes ---
    B3, C3, N3 = 10, 4, 64
    v3 = jax.random.normal(k5, (B3, C3, N3), dtype=jnp.float32)
    e3 = jax.random.randint(k2, (B3, 1, N3, NEIGHBORHOOD_SIZE), 0, N3)
    g3 = 1.0 + 0.1 * jax.random.normal(k4, (C3,), dtype=jnp.float32)
    b3 = 0.1 * jax.random.normal(k3, (C3,), dtype=jnp.float32)
    out3 = jax.block_until_ready(
        binary_tree_layer_norm(v3, e3, g3, b3, eps=1e-5, force_tiled=True, lane_block=128))
    assert jnp.allclose(out3, _reference(v3, g3, b3, eps=1e-5), atol=5e-5, rtol=5e-5), \
        "mismatch (tiled two-pass path)"

    print("KERNEL_OK")
</pallas_src>

<mosaic_0001>
module attributes {stable_mosaic.version = 11 : i64} {
  func.func @_ln_whole_row_kernel(%arg0: i32, %arg1: memref<2x128xf32, #tpu.memory_space<vmem>>, %arg2: memref<1x128xf32, #tpu.memory_space<vmem>>, %arg3: memref<1x128xf32, #tpu.memory_space<vmem>>, %arg4: memref<2x128xf32, #tpu.memory_space<vmem>>) attributes {dimension_semantics = [#tpu.dimension_semantics<parallel>], iteration_bounds = array<i64: 1>, scalar_prefetch = 0 : i64, scratch_operands = 0 : i64, tpu.core_type = #tpu.core_type<tc>, window_params = [{transform_indices = @transform_0, window_bounds = array<i64: 2, 128>}, {pipeline_mode = #tpu.pipeline_mode<synchronous>, transform_indices = @transform_1, window_bounds = array<i64: 1, 128>}, {pipeline_mode = #tpu.pipeline_mode<synchronous>, transform_indices = @transform_2, window_bounds = array<i64: 1, 128>}, {transform_indices = @transform_3, window_bounds = array<i64: 2, 128>}]} {
    %c0 = arith.constant 0 : index
    %c0_0 = arith.constant 0 : index
    %0 = vector.load %arg1[%c0, %c0_0] : memref<2x128xf32, #tpu.memory_space<vmem>>, vector<2x128xf32>
    %cst = arith.constant dense<0.000000e+00> : vector<2xf32>
    %1 = vector.multi_reduction <add>, %0, %cst [1] : vector<2x128xf32> to vector<2xf32>
    %2 = vector.shape_cast %1 : vector<2xf32> to vector<2x1xf32>
    %cst_1 = arith.constant 1.562500e-02 : f32
    %3 = vector.broadcast %cst_1 : f32 to vector<2x1xf32>
    %4 = arith.mulf %2, %3 : vector<2x1xf32>
    %5 = vector.broadcast %4 : vector<2x1xf32> to vector<2x128xf32>
    %6 = arith.subf %0, %5 : vector<2x128xf32>
    %7 = arith.mulf %6, %6 : vector<2x128xf32>
    %cst_2 = arith.constant dense<0.000000e+00> : vector<2xf32>
    %8 = vector.multi_reduction <add>, %7, %cst_2 [1] : vector<2x128xf32> to vector<2xf32>
    %9 = vector.shape_cast %8 : vector<2xf32> to vector<2x1xf32>
    %10 = arith.mulf %4, %4 : vector<2x1xf32>
    %cst_3 = arith.constant 6.400000e+01 : f32
    %11 = vector.broadcast %cst_3 : f32 to vector<2x1xf32>
    %12 = arith.mulf %11, %10 : vector<2x1xf32>
    %13 = arith.subf %9, %12 : vector<2x1xf32>
    %cst_4 = arith.constant 1.562500e-02 : f32
    %14 = vector.broadcast %cst_4 : f32 to vector<2x1xf32>
    %15 = arith.mulf %13, %14 : vector<2x1xf32>
    %cst_5 = arith.constant 0.000000e+00 : f32
    %16 = vector.broadcast %cst_5 : f32 to vector<2x1xf32>
    %17 = arith.maximumf %15, %16 : vector<2x1xf32>
    %18 = math.sqrt %17 : vector<2x1xf32>
    %cst_6 = arith.constant 9.99999974E-6 : f32
    %19 = vector.broadcast %cst_6 : f32 to vector<2x1xf32>
    %20 = arith.addf %18, %19 : vector<2x1xf32>
    %cst_7 = arith.constant 1.000000e+00 : f32
    %21 = vector.broadcast %cst_7 : f32 to vector<2x1xf32>
    %22 = arith.divf %21, %20 : vector<2x1xf32>
    %23 = vector.broadcast %22 : vector<2x1xf32> to vector<2x128xf32>
    %24 = arith.mulf %6, %23 : vector<2x128xf32>
    %c0_8 = arith.constant 0 : index
    %c0_9 = arith.constant 0 : index
    %25 = vector.load %arg2[%c0_8, %c0_9] : memref<1x128xf32, #tpu.memory_space<vmem>>, vector<1x128xf32>
    %26 = vector.broadcast %25 : vector<1x128xf32> to vector<2x128xf32>
    %27 = arith.mulf %24, %26 : vector<2x128xf32>
    %c0_10 = arith.constant 0 : index
    %c0_11 = arith.constant 0 : index
    %28 = vector.load %arg3[%c0_10, %c0_11] : memref<1x128xf32, #tpu.memory_space<vmem>>, vector<1x128xf32>
    %29 = vector.broadcast %28 : vector<1x128xf32> to vector<2x128xf32>
    %30 = arith.addf %27, %29 : vector<2x128xf32>
    %c0_12 = arith.constant 0 : index
    %c0_13 = arith.constant 0 : index
    %31 = vector.load %arg4[%c0_12, %c0_13] : memref<2x128xf32, #tpu.memory_space<vmem>>, vector<2x128xf32>
    tpu.vector_store %arg4[%c0_12, %c0_13], %30 {strides = array<i32>} : memref<2x128xf32, #tpu.memory_space<vmem>>, vector<2x128xf32>,
    return
  }
  func.func @transform_0(%arg0: i32) -> (i32, i32) {
    %c0_i32 = arith.constant 0 : i32
    %c0_i32_0 = arith.constant 0 : i32
    return %arg0, %c0_i32 : i32, i32
  }
  func.func @transform_1(%arg0: i32) -> (i32, i32) {
    %c0_i32 = arith.constant 0 : i32
    %c0_i32_0 = arith.constant 0 : i32
    %c0_i32_1 = arith.constant 0 : i32
    return %c0_i32, %c0_i32_0 : i32, i32
  }
  func.func @transform_2(%arg0: i32) -> (i32, i32) {
    %c0_i32 = arith.constant 0 : i32
    %c0_i32_0 = arith.constant 0 : i32
    %c0_i32_1 = arith.constant 0 : i32
    return %c0_i32, %c0_i32_0 : i32, i32
  }
  func.func @transform_3(%arg0: i32) -> (i32, i32) {
    %c0_i32 = arith.constant 0 : i32
    %c0_i32_0 = arith.constant 0 : i32
    return %arg0, %c0_i32 : i32, i32
  }
}

</mosaic_0001>

<llo_original>
// kernel: tpu_custom_call.1
$region0: #{tpu_custom_call.1}
  #allocation0 [shape = 'u32[]', space=smem, size = 0x4, offset = 0x4, fixed_abs, tag = 'smem constant byte address 0x4 - core index']
  #allocation1 [shape = 'u32[144,128]{1,0:T(1,128)}', space=vmem, size = 0x12000, scoped, tag = 'internal scratch']
  %s0 = inlined_call_operand.hbm [shape: f32[2,128], index: 0, kind: input, shape index: {}]
  %s1 = inlined_call_operand.vmem [shape: f32[1,128], index: 1, kind: input, shape index: {}]
  %s2 = inlined_call_operand.vmem [shape: f32[1,128], index: 2, kind: input, shape index: {}]
  %s3 = inlined_call_operand.hbm [shape: f32[2,128], index: 3, kind: output, shape index: {}]
  %s4 = sld [smem:[#allocation0]]
  $region26: #{tpu_custom_call.1} parent=0
    _
  %s6 = ssub.s32 1, %s4
  %s7 = scalar_select 0, %s6, %s4
  $region1: #{tpu_custom_call.1} parent=0
    #allocation2 [shape = 'u8[1024]{0}', space=vmem, size = 0x400, scoped, tag = 'input window, operand 0, single buffered']
    #allocation3 [shape = 's32[1]{0}', space=sflag, size = 0x4, scoped, tag = 'scoped memory for tpu_custom_call.1']
    #allocation4 [shape = 's32[1]{0}', space=sflag, size = 0x4, scoped, tag = 'scoped memory for tpu_custom_call.1']
    #allocation5 [shape = 'u8[1024]{0}', space=vmem, size = 0x400, scoped, tag = 'output window, operand 0, single buffered']
    %8 = vsyncpa [#allocation3], 0
    %9 = vsyncpa [#allocation4], 0
    // Predicated region
    $region2: #{tpu_custom_call.1} parent=1 // pred_check
      _
    $region3: #{tpu_custom_call.1} parent=1 // pred_check_branch
      %11 = sbr.rel (0) target = $region5
    $region4: #{tpu_custom_call.1} parent=1 // pred_region
      %s13 = ssub.s32 32, 32
      %14 = vsyncadd [#allocation3], %s13
      %s16 = sshll.u32 [#allocation2], 4
      %s17 = int_to_ptr.vmem [resolvable:$true] %s16
      %19 = dma.hbm_to_vmem [thread:$0]  %s0, 32, %s17, [#allocation3]
    $region5: #{tpu_custom_call.1} parent=1 // pred_fallthru
      _
    // Predicated region
    $region6: #{tpu_custom_call.1} parent=1 // pred_check
      _
    $region7: #{tpu_custom_call.1} parent=1 // pred_check_branch
      %21 = sbr.rel (0) target = $region9
    $region8: #{tpu_custom_call.1} parent=1 // pred_region
      _
    $region9: #{tpu_custom_call.1} parent=1 // pred_fallthru
      _
    // Predicated region
    $region10: #{tpu_custom_call.1} parent=1 // pred_check
      _
    $region11: #{tpu_custom_call.1} parent=1 // pred_check_branch
      %23 = sbr.rel (0) target = $region13
    $region12: #{tpu_custom_call.1} parent=1 // pred_region
      _
    $region13: #{tpu_custom_call.1} parent=1 // pred_fallthru
      _
    // Predicated region
    $region14: #{tpu_custom_call.1} parent=1 // pred_check
      _
    $region15: #{tpu_custom_call.1} parent=1 // pred_check_branch
      %25 = sbr.rel (0) target = $region17
    $region16: #{tpu_custom_call.1} parent=1 // pred_region
      %26 = dma.done [#allocation3], 32
    $region17: #{tpu_custom_call.1} parent=1 // pred_fallthru
      _
    %v27 = vld [vmem:[#allocation2] sm:$0x3]
    %vm28 = vcmask 1041408
    %v29 = vsel %vm28, %v27, 0.0
    %30 = vadd.xlane.f32.xlu0 %v29
    %v31 = vpop.xlane.xlu0 %30
    %v32 = vmul.f32 %v31, 0.015625
    %v33 = vsub.f32 %v27, %v32
    %v34 = vmul.f32 %v33, %v33
    %v35 = vsel %vm28, %v34, 0.0
    %36 = vadd.xlane.f32.xlu0 %v35
    %v37 = vpop.xlane.xlu0 %36
    %v38 = vmul.f32 %v32, %v32
    %v39 = vmul.f32 %v38, 64.0
    %v40 = vsub.f32 %v37, %v39
    %v41 = vmul.f32 %v40, 0.015625
    %v42 = vmax.f32 %v41, 0.0
    %v43 = vrsqrt.pop %v42
    %v44 = vmul.f32 %v42, %v43
    %vm45 = vcmp.eq.f32.partialorder %v42, inf
    %v46 = vsel %vm45, %v42, %v44
    %vm47 = vcmp.eq.f32.partialorder %v42, 0.0
    %v48 = vand.u32 %v42, 2147483648
    %v49 = vsel %vm47, %v48, %v46
    %v50 = vadd.f32 %v49, 1e-05
    %v51 = vrcp.pop %v50
    %v52 = vmul.f32 1.0, %v51
    %v53 = vmul.f32 %v33, %v52
    %v54 = vld [vmem:[%s1] sm:$0x1]
    %v56 = vlaneseq
    %v57 = vshrl.u32 %v56, 7
    %v58 = vsub.s32 0, %v57
    %v59 = vrot.slane %v54, %v58
    %v61 = vmul.f32 %v53, %v59
    %v62 = vld [vmem:[%s2] sm:$0x1]
    %v64 = vlaneseq
    %v65 = vshrl.u32 %v64, 7
    %v66 = vsub.s32 0, %v65
    %v67 = vrot.slane %v62, %v66
    %v69 = vadd.f32 %v61, %v67
    %70 = vst [vmem:[#allocation5] sm:$0x3] %v69
    // Predicated region
    $region18: #{tpu_custom_call.1} parent=1 // pred_check
      _
    $region19: #{tpu_custom_call.1} parent=1 // pred_check_branch
      %72 = sbr.rel (0) target = $region21
    $region20: #{tpu_custom_call.1} parent=1 // pred_region
      %s74 = ssub.s32 32, 32
      %75 = vsyncadd [#allocation4], %s74
      %s77 = sshll.u32 [#allocation5], 4
      %s78 = int_to_ptr.vmem [resolvable:$true] %s77
      %80 = dma.vmem_to_hbm [thread:$0]  %s78, 32, %s3, [#allocation4]
    $region21: #{tpu_custom_call.1} parent=1 // pred_fallthru
      _
    // Predicated region
    $region22: #{tpu_custom_call.1} parent=1 // pred_check
      _
    $region23: #{tpu_custom_call.1} parent=1 // pred_check_branch
      %82 = sbr.rel (0) target = $region25
    $region24: #{tpu_custom_call.1} parent=1 // pred_region
      %83 = dma.done [#allocation4], 32
    $region25: #{tpu_custom_call.1} parent=1 // pred_fallthru
      _
    %84 = vsyncpa [#allocation3], 1
    %85 = vsyncpa [#allocation4], 1

</llo_original>
